<compile_context>
chip_gen: v7x
topology: tpu7x:2x2x1
jax: 0.10.0
libtpu: 0.0.40
codegen_flags: <defaults>
</compile_context>

<pallas_src>
import jax
import jax.numpy as jnp
from jax.experimental import pallas as pl
from jax.experimental.pallas import tpu as pltpu

LANE = 128      # lane-dense output slab width
TN_MAX = 4096   # point-tile cap (sweepable 2048-8192; VMEM-safe on every gen)


def _round_up(x, m):
    return ((x + m - 1) // m) * m


# ----------------------------------------------------------------------------
# Click-only prep kernel (hoisted out of the point-tiled hot loop), fused:
#   cls_logits = clicks @ W_cls + b_cls                 (M, K)
#   w_eff      = clicks^T @ cls_logits                  (C, K)
# Both dots are tiny and run once per refine() call.
# ----------------------------------------------------------------------------
def _click_prep_kernel(clicks_ref, clicks_t_ref, wcls_ref, bcls_ref,
                       cls_ref, weff_ref):
    cls = jnp.dot(clicks_ref[...], wcls_ref[...],
                  preferred_element_type=jnp.float32) + bcls_ref[...]
    cls_ref[...] = cls
    weff_ref[...] = jnp.dot(clicks_t_ref[...], cls,
                            preferred_element_type=jnp.float32)


def click_prep(clicks_feat, clicks_t, w_cls, b_cls):
    M, C = clicks_feat.shape
    K = w_cls.shape[1]
    return pl.pallas_call(
        _click_prep_kernel,
        out_shape=(jax.ShapeDtypeStruct((M, K), jnp.float32),
                   jax.ShapeDtypeStruct((C, K), jnp.float32)),
        grid_spec=pltpu.PrefetchScalarGridSpec(
            num_scalar_prefetch=0,
            grid=(1,),
            in_specs=[
                pl.BlockSpec((M, C), lambda i: (0, 0)),
                pl.BlockSpec((C, M), lambda i: (0, 0)),
                pl.BlockSpec((C, K), lambda i: (0, 0)),
                pl.BlockSpec((1, K), lambda i: (0, 0)),
            ],
            out_specs=(pl.BlockSpec((M, K), lambda i: (0, 0)),
                       pl.BlockSpec((C, K), lambda i: (0, 0))),
        ),
        compiler_params=pltpu.CompilerParams(dimension_semantics=("arbitrary",)),
    )(clicks_feat, clicks_t, w_cls, b_cls)


# ----------------------------------------------------------------------------
# Fused point-tiled kernel: one MXU push per tile produces the full 128-lane
# output slab.  thr_ref carries mask_threshold in the thresholded-mask lanes and
# -inf elsewhere, so the epilogue is a single compare+select (no iota, no column
# mask) and threshold changes never recompile.
# ----------------------------------------------------------------------------
def _fused_point_kernel(feat_ref, wcat_ref, bcat_ref, thr_ref, out_ref):
    acc = jnp.dot(feat_ref[...], wcat_ref[...],
                  preferred_element_type=jnp.float32)
    acc = acc + bcat_ref[...]
    out = jnp.where(acc <= thr_ref[...], 0.0, acc)
    out_ref[...] = out.astype(out_ref.dtype)


def _pick_point_tile(n, point_tile):
    if point_tile is not None:
        return max(8, _round_up(point_tile, 8))
    # Aim for >= 4 grid steps once N is large (v7x: 2 TCs get >= 2 steps each),
    # keep each step >= 512 rows (per-step overhead), cap at TN_MAX (VMEM).
    tn = max(512, _round_up(pl.cdiv(n, 4), 8))
    tn = min(tn, TN_MAX)
    if tn >= n and n >= 8:
        tn = (n // 8) * 8   # keep the block <= array rows; last block may be ragged
    return tn


def _fused_point_pass(feat, w_cat, b_cat, thr_vec, out_dtype, point_tile=None):
    N, C = feat.shape
    tn = _pick_point_tile(N, point_tile)
    grid = pl.cdiv(N, tn)
    return pl.pallas_call(
        _fused_point_kernel,
        out_shape=jax.ShapeDtypeStruct((N, LANE), out_dtype),
        grid_spec=pltpu.PrefetchScalarGridSpec(
            num_scalar_prefetch=0,
            grid=(grid,),
            in_specs=[
                pl.BlockSpec((tn, C), lambda i: (i, 0)),
                pl.BlockSpec((C, LANE), lambda i: (0, 0)),
                pl.BlockSpec((1, LANE), lambda i: (0, 0)),
                pl.BlockSpec((1, LANE), lambda i: (0, 0)),
            ],
            out_specs=pl.BlockSpec((tn, LANE), lambda i: (i, 0)),
        ),
        compiler_params=pltpu.CompilerParams(
            dimension_semantics=("parallel",)),
    )(feat, w_cat, b_cat, thr_vec)


# ----------------------------------------------------------------------------
# Segmentor wrapper: forward_eval semantics (+ forward_test/demo thresholding)
# ----------------------------------------------------------------------------
def mask3d_segmentor_forward_eval(feat, clicks_feat, params, mask_threshold=0.0,
                                  *, compute_dtype=jnp.bfloat16,
                                  out_dtype=jnp.bfloat16, point_tile=None):
    N, C = feat.shape
    M = clicks_feat.shape[0]
    K = params["w_seg"].shape[1]
    assert 2 * K + 2 * M <= LANE, "class/click widths must fit one 128-lane slab"

    # ---- click-only prep (O(C*K*M), hoisted out of the point-tiled hot loop) ----
    clicks_f32 = clicks_feat.astype(jnp.float32)
    clicks_t = clicks_f32.T                                   # (C, M)
    cls_logits, w_eff = click_prep(
        clicks_f32, clicks_t,
        params["w_cls"].astype(jnp.float32),
        params["b_cls"].reshape(1, K).astype(jnp.float32),
    )

    # Lane-dense fused weight / bias / threshold slabs (built once per refine()).
    pad_w = LANE - (2 * K + 2 * M)
    w_cat = jnp.concatenate(
        [params["w_seg"].astype(jnp.float32), w_eff, clicks_t, clicks_t,
         jnp.zeros((C, pad_w), jnp.float32)], axis=-1).astype(compute_dtype)
    b_cat = jnp.concatenate(
        [params["b_seg"].reshape(1, K).astype(jnp.float32),
         jnp.zeros((1, LANE - K), jnp.float32)], axis=-1)
    lane = jnp.arange(LANE, dtype=jnp.int32)
    in_thr = (lane >= 2 * K + M) & (lane < 2 * K + 2 * M)
    thr_vec = jnp.where(in_thr, jnp.asarray(mask_threshold, jnp.float32),
                        -jnp.inf).reshape(1, LANE).astype(jnp.float32)

    # ---- single fused pass over the points (bf16 in, f32 acc, bf16 out) ----
    slab = _fused_point_pass(feat.astype(compute_dtype), w_cat, b_cat, thr_vec,
                             out_dtype, point_tile)

    pcd_pred = slab[:, 0:K]                               # backbone seg_logits
    seg_logits = slab[:, K:2 * K]                         # forward_eval: masks @ cls
    masks_heatmap = slab[:, 2 * K:2 * K + M]              # mask_decoder heatmap
    masks_thresholded = slab[:, 2 * K + M:2 * K + 2 * M]  # forward_test/demo masking

    # TODO(synk): clicker / LOSSES.build(loss) / iterative forward_train loop and
    # the sparse-conv pcd_backbone / mask_decoder internals are external
    # data-dependent modules with no tensor-kernel equivalent.
    return dict(
        seg_logits=seg_logits,
        seg_logits_last=pcd_pred,
        masks_heatmap=masks_heatmap,
        cls_logits=cls_logits,
        masks_heatmap_thresholded=masks_thresholded,
        fused_slab=slab,   # lane-dense raw output; consumers may slice it lazily
    )


if __name__ == "__main__":
    # Force full-f32 matmuls for the pure-JAX reference so the comparison is
    # about the kernel's bf16 path, not XLA's default MXU precision.
    jax.config.update("jax_default_matmul_precision", "highest")

    # Small deterministic shapes; N_POINTS intentionally NOT a multiple of the
    # tile so the cdiv + ragged-last-block path is exercised.
    N_POINTS, C, N_CLICKS, NUM_CLASSES = 300, 32, 8, 20
    MASK_THRESHOLD = 0.0

    key = jax.random.PRNGKey(0)
    k_feat, k_clicks, k_wseg, k_bseg, k_wcls, k_bcls = jax.random.split(key, 6)

    feat = jax.random.normal(k_feat, (N_POINTS, C), dtype=jnp.float32)
    clicks_feat = jax.random.normal(k_clicks, (N_CLICKS, C), dtype=jnp.float32)
    params = {
        "w_seg": jax.random.normal(k_wseg, (C, NUM_CLASSES), jnp.float32) * 0.05,
        "b_seg": jax.random.normal(k_bseg, (NUM_CLASSES,), jnp.float32) * 0.01,
        "w_cls": jax.random.normal(k_wcls, (C, NUM_CLASSES), jnp.float32) * 0.05,
        "b_cls": jax.random.normal(k_bcls, (NUM_CLASSES,), jnp.float32) * 0.01,
    }

    # Small explicit tile -> multi-step grid (3 steps) with a ragged last block.
    out = mask3d_segmentor_forward_eval(feat, clicks_feat, params, MASK_THRESHOLD,
                                        point_tile=128)
    jax.block_until_ready(out)

    # Pure-JAX f32 reference (original, un-refactored order of operations).
    pcd_pred_ref = feat @ params["w_seg"] + params["b_seg"]
    masks_ref = feat @ clicks_feat.T
    cls_ref = clicks_feat @ params["w_cls"] + params["b_cls"]
    seg_ref = masks_ref @ cls_ref
    masks_thr_ref = jnp.where(masks_ref <= MASK_THRESHOLD, 0.0, masks_ref)

    def f32(x):
        return x.astype(jnp.float32)

    # cls_logits stays in an f32-only Pallas kernel -> tight tolerance.
    assert jnp.allclose(out["cls_logits"], cls_ref, atol=5e-4, rtol=5e-4)
    # Point-path outputs go through bf16 inputs + bf16 store (f32 accumulation);
    # seg_logits additionally uses the algebraic refold feat @ (clicks^T @ cls).
    assert jnp.allclose(f32(out["seg_logits_last"]), pcd_pred_ref, atol=2e-2, rtol=2e-2)
    assert jnp.allclose(f32(out["masks_heatmap"]), masks_ref, atol=0.25, rtol=5e-2)
    assert jnp.allclose(f32(out["seg_logits"]), seg_ref, atol=0.25, rtol=5e-2)
    assert jnp.allclose(f32(out["masks_heatmap_thresholded"]), masks_thr_ref,
                        atol=0.25, rtol=5e-2)

    # Also exercise the auto tile-size path (grid picked from N).
    out2 = mask3d_segmentor_forward_eval(feat, clicks_feat, params, MASK_THRESHOLD)
    jax.block_until_ready(out2)
    assert out2["seg_logits"].shape == (N_POINTS, NUM_CLASSES)
    assert jnp.allclose(f32(out2["masks_heatmap"]), masks_ref, atol=0.25, rtol=5e-2)

    print("KERNEL_OK")
</pallas_src>

<mosaic_0001>
module attributes {stable_mosaic.version = 11 : i64} {
  func.func @_click_prep_kernel(%arg0: i32, %arg1: memref<8x32xf32, #tpu.memory_space<vmem>>, %arg2: memref<32x8xf32, #tpu.memory_space<vmem>>, %arg3: memref<32x20xf32, #tpu.memory_space<vmem>>, %arg4: memref<1x20xf32, #tpu.memory_space<vmem>>, %arg5: memref<8x20xf32, #tpu.memory_space<vmem>>, %arg6: memref<32x20xf32, #tpu.memory_space<vmem>>) attributes {dimension_semantics = [#tpu.dimension_semantics<arbitrary>], iteration_bounds = array<i64: 1>, scalar_prefetch = 0 : i64, scratch_operands = 0 : i64, tpu.core_type = #tpu.core_type<tc>, window_params = [{pipeline_mode = #tpu.pipeline_mode<synchronous>, transform_indices = @transform_0, window_bounds = array<i64: 8, 32>}, {pipeline_mode = #tpu.pipeline_mode<synchronous>, transform_indices = @transform_1, window_bounds = array<i64: 32, 8>}, {pipeline_mode = #tpu.pipeline_mode<synchronous>, transform_indices = @transform_2, window_bounds = array<i64: 32, 20>}, {pipeline_mode = #tpu.pipeline_mode<synchronous>, transform_indices = @transform_3, window_bounds = array<i64: 1, 20>}, {pipeline_mode = #tpu.pipeline_mode<synchronous>, transform_indices = @transform_4, window_bounds = array<i64: 8, 20>}, {pipeline_mode = #tpu.pipeline_mode<synchronous>, transform_indices = @transform_5, window_bounds = array<i64: 32, 20>}]} {
    %c0 = arith.constant 0 : index
    %c0_0 = arith.constant 0 : index
    %0 = vector.load %arg1[%c0, %c0_0] : memref<8x32xf32, #tpu.memory_space<vmem>>, vector<8x32xf32>
    %c0_1 = arith.constant 0 : index
    %c0_2 = arith.constant 0 : index
    %1 = vector.load %arg3[%c0_1, %c0_2] : memref<32x20xf32, #tpu.memory_space<vmem>>, vector<32x20xf32>
    %cst = arith.constant dense<0.000000e+00> : vector<8x20xf32>
    %2 = tpu.matmul %0, %1, %cst {dimension_numbers = #tpu.dot_dimension_numbers<[1], [0], [0], [1], [0, 0, 1, 1], [], []>, precision = #tpu.contract_precision<fp32>} : vector<8x32xf32>, vector<32x20xf32>, vector<8x20xf32> -> vector<8x20xf32>
    %c0_3 = arith.constant 0 : index
    %c0_4 = arith.constant 0 : index
    %3 = vector.load %arg4[%c0_3, %c0_4] : memref<1x20xf32, #tpu.memory_space<vmem>>, vector<1x20xf32>
    %4 = vector.broadcast %3 : vector<1x20xf32> to vector<8x20xf32>
    %5 = arith.addf %2, %4 : vector<8x20xf32>
    %c0_5 = arith.constant 0 : index
    %c0_6 = arith.constant 0 : index
    %6 = vector.load %arg5[%c0_5, %c0_6] : memref<8x20xf32, #tpu.memory_space<vmem>>, vector<8x20xf32>
    tpu.vector_store %arg5[%c0_5, %c0_6], %5 {strides = array<i32>} : memref<8x20xf32, #tpu.memory_space<vmem>>, vector<8x20xf32>,
    %c0_7 = arith.constant 0 : index
    %c0_8 = arith.constant 0 : index
    %7 = vector.load %arg2[%c0_7, %c0_8] : memref<32x8xf32, #tpu.memory_space<vmem>>, vector<32x8xf32>
    %cst_9 = arith.constant dense<0.000000e+00> : vector<32x20xf32>
    %8 = tpu.matmul %7, %5, %cst_9 {dimension_numbers = #tpu.dot_dimension_numbers<[1], [0], [0], [1], [0, 0, 1, 1], [], []>, precision = #tpu.contract_precision<fp32>} : vector<32x8xf32>, vector<8x20xf32>, vector<32x20xf32> -> vector<32x20xf32>
    %c0_10 = arith.constant 0 : index
    %c0_11 = arith.constant 0 : index
    %9 = vector.load %arg6[%c0_10, %c0_11] : memref<32x20xf32, #tpu.memory_space<vmem>>, vector<32x20xf32>
    tpu.vector_store %arg6[%c0_10, %c0_11], %8 {strides = array<i32>} : memref<32x20xf32, #tpu.memory_space<vmem>>, vector<32x20xf32>,
    return
  }
  func.func @transform_0(%arg0: i32) -> (i32, i32) {
    %c0_i32 = arith.constant 0 : i32
    %c0_i32_0 = arith.constant 0 : i32
    %c0_i32_1 = arith.constant 0 : i32
    return %c0_i32, %c0_i32_0 : i32, i32
  }
  func.func @transform_1(%arg0: i32) -> (i32, i32) {
    %c0_i32 = arith.constant 0 : i32
    %c0_i32_0 = arith.constant 0 : i32
    %c0_i32_1 = arith.constant 0 : i32
    return %c0_i32, %c0_i32_0 : i32, i32
  }
  func.func @transform_2(%arg0: i32) -> (i32, i32) {
    %c0_i32 = arith.constant 0 : i32
    %c0_i32_0 = arith.constant 0 : i32
    %c0_i32_1 = arith.constant 0 : i32
    return %c0_i32, %c0_i32_0 : i32, i32
  }
  func.func @transform_3(%arg0: i32) -> (i32, i32) {
    %c0_i32 = arith.constant 0 : i32
    %c0_i32_0 = arith.constant 0 : i32
    %c0_i32_1 = arith.constant 0 : i32
    return %c0_i32, %c0_i32_0 : i32, i32
  }
  func.func @transform_4(%arg0: i32) -> (i32, i32) {
    %c0_i32 = arith.constant 0 : i32
    %c0_i32_0 = arith.constant 0 : i32
    %c0_i32_1 = arith.constant 0 : i32
    return %c0_i32, %c0_i32_0 : i32, i32
  }
  func.func @transform_5(%arg0: i32) -> (i32, i32) {
    %c0_i32 = arith.constant 0 : i32
    %c0_i32_0 = arith.constant 0 : i32
    %c0_i32_1 = arith.constant 0 : i32
    return %c0_i32, %c0_i32_0 : i32, i32
  }
}

</mosaic_0001>

<llo_original>
// kernel: tpu_custom_call.1
$region0: #{tpu_custom_call.1}
  #allocation0 [shape = 'u32[]', space=smem, size = 0x4, offset = 0x4, fixed_abs, tag = 'smem constant byte address 0x4 - core index']
  #allocation1 [shape = 'u32[144,128]{1,0:T(1,128)}', space=vmem, size = 0x12000, scoped, tag = 'internal scratch']
  %s0 = inlined_call_operand.vmem [shape: f32[8,32], index: 0, kind: input, shape index: {}]
  %s1 = inlined_call_operand.vmem [shape: f32[32,8], index: 1, kind: input, shape index: {}]
  %s2 = inlined_call_operand.vmem [shape: f32[32,20], index: 2, kind: input, shape index: {}]
  %s3 = inlined_call_operand.vmem [shape: f32[1,20], index: 3, kind: input, shape index: {}]
  %s4 = inlined_call_operand.hbm [shape: f32[8,20], index: 4, kind: output, shape index: {0}]
  %s5 = inlined_call_operand.vmem [shape: f32[32,20], index: 5, kind: output, shape index: {1}]
  %6 = xla_tuple %s4, %s5
  %s7 = sld [smem:[#allocation0]]
  $region34: #{tpu_custom_call.1} parent=0
    _
  %s9 = ssub.s32 1, %s7
  %s10 = scalar_select 0, %s9, %s7
  $region1: #{tpu_custom_call.1} parent=0
    #allocation2 [shape = 'u8[4096]{0}', space=vmem, size = 0x1000, scoped, tag = 'output window, operand 0, single buffered']
    #allocation3 [shape = 's32[1]{0}', space=sflag, size = 0x4, scoped, tag = 'scoped memory for tpu_custom_call.1']
    %11 = vsyncpa [#allocation3], 0
    // Predicated region
    $region2: #{tpu_custom_call.1} parent=1 // pred_check
      _
    $region3: #{tpu_custom_call.1} parent=1 // pred_check_branch
      %13 = sbr.rel (0) target = $region5
    $region4: #{tpu_custom_call.1} parent=1 // pred_region
      _
    $region5: #{tpu_custom_call.1} parent=1 // pred_fallthru
      _
    // Predicated region
    $region6: #{tpu_custom_call.1} parent=1 // pred_check
      _
    $region7: #{tpu_custom_call.1} parent=1 // pred_check_branch
      %15 = sbr.rel (0) target = $region9
    $region8: #{tpu_custom_call.1} parent=1 // pred_region
      _
    $region9: #{tpu_custom_call.1} parent=1 // pred_fallthru
      _
    // Predicated region
    $region10: #{tpu_custom_call.1} parent=1 // pred_check
      _
    $region11: #{tpu_custom_call.1} parent=1 // pred_check_branch
      %17 = sbr.rel (0) target = $region13
    $region12: #{tpu_custom_call.1} parent=1 // pred_region
      _
    $region13: #{tpu_custom_call.1} parent=1 // pred_fallthru
      _
    // Predicated region
    $region14: #{tpu_custom_call.1} parent=1 // pred_check
      _
    $region15: #{tpu_custom_call.1} parent=1 // pred_check_branch
      %19 = sbr.rel (0) target = $region17
    $region16: #{tpu_custom_call.1} parent=1 // pred_region
      _
    $region17: #{tpu_custom_call.1} parent=1 // pred_fallthru
      _
    %v20 = vld [vmem:[%s0] sm:$0xff]
    %v21 = vld [vmem:[%s2] sm:$0xff]
    %v22 = vld [vmem:[%s2 + $0x8] sm:$0xff]
    %v23 = vld [vmem:[%s2 + $0x10] sm:$0xff]
    %v24 = vld [vmem:[%s2 + $0x18] sm:$0xff]
    %v25 = vld [vmem:[%s3] sm:$0x1]
    %v27 = vlaneseq
    %v28 = vshrl.u32 %v27, 7
    %v29 = vsub.s32 0, %v28
    %v30 = vrot.slane %v25, %v29
    %vm32 = vcmask 261120
    %v34 = vsel %vm32, %v20, 0
    %36 = vmatprep.subr.mxu0 0.0
    %v37 = vand.u32 %v21, 4294901760
    %38 = vmatpush1.msra.mxu0 %v37
    %39 = vmatprep.subr.mxu0 0.0
    %v40 = vand.u32 %v22, 4294901760
    %41 = vmatpush1.msra.mxu0 %v40
    %42 = vmatprep.subr.mxu0 0.0
    %v43 = vand.u32 %v23, 4294901760
    %44 = vmatpush1.msra.mxu0 %v43
    %45 = vmatprep.subr.mxu0 0.0
    %v46 = vand.u32 %v24, 4294901760
    %47 = vmatpush1.msra.mxu0 %v46
    %48 = vmatprep.subr.mxu0 0.0
    %49 = vmatpush1.msra.mxu0 0.0
    %50 = vmatprep.subr.mxu0 0.0
    %51 = vmatpush1.msra.mxu0 0.0
    %52 = vmatprep.subr.mxu0 0.0
    %53 = vmatpush1.msra.mxu0 0.0
    %54 = vmatprep.subr.mxu0 0.0
    %55 = vmatpush1.msra.mxu0 0.0
    %56 = vmatprep.subr.mxu0 0.0
    %57 = vmatpush1.msra.mxu0 0.0
    %58 = vmatprep.subr.mxu0 0.0
    %59 = vmatpush1.msra.mxu0 0.0
    %60 = vmatprep.subr.mxu0 0.0
    %61 = vmatpush1.msra.mxu0 0.0
    %62 = vmatprep.subr.mxu0 0.0
    %63 = vmatpush1.msra.mxu0 0.0
    %64 = vmatprep.subr.mxu0 0.0
    %65 = vmatpush1.msra.mxu0 0.0
    %66 = vmatprep.subr.mxu0 0.0
    %67 = vmatpush1.msra.mxu0 0.0
    %68 = vmatprep.subr.mxu0 0.0
    %69 = vmatpush1.msra.mxu0 0.0
    %70 = vmatprep.subr.mxu0 0.0
    %71 = vmatpush1.msra.mxu0 0.0
    %72 = vmatprep.subr.mxu0 0.0
    %73 = vmatpush1.msra.mxu0 0.0
    %74 = vmatprep.subr.mxu0 0.0
    %75 = vmatpush1.msra.mxu0 0.0
    %76 = vmatprep.subr.mxu0 0.0
    %77 = vmatpush1.msra.mxu0 0.0
    %78 = vmatprep.subr.mxu0 0.0
    %79 = vmatpush1.msra.mxu0 0.0
    %80 = vmatprep.subr.mxu0 0.0
    %81 = vmatpush1.msra.mxu0 0.0
    %82 = vmatprep.subr.mxu0 0.0
    %83 = vmatpush1.msra.mxu0 0.0
    %84 = vmatprep.subr.mxu0 0.0
    %85 = vmatpush1.msra.mxu0 0.0
    %86 = vmatprep.subr.mxu0 0.0
    %87 = vmatpush1.msra.mxu0 0.0
    %88 = vmatprep.subr.mxu0 0.0
    %89 = vmatpush1.msra.mxu0 0.0
    %90 = vmatprep.subr.mxu0 0.0
    %91 = vmatpush1.msra.mxu0 0.0
    %92 = vmatprep.subr.mxu0 0.0
    %93 = vmatpush1.msra.mxu0 0.0
    %94 = vmatprep.subr.mxu0 0.0
    %95 = vmatpush1.msra.mxu0 0.0
    %96 = vmatprep.subr.mxu0 0.0
    %97 = vmatpush1.msra.mxu0 0.0
    %98 = vmatprep.subr.mxu0 0.0
    %99 = vmatpush1.msra.mxu0 0.0
    %100 = vmatprep.subr.mxu0 0.0
    %101 = vmatpush1.msra.mxu0 0.0
    %102 = vmatprep.subr.mxu0 0.0
    %103 = vmatpush1.msra.mxu0 0.0
    %104 = vmatprep.mubr.f32.mxu0 0.0
    %v105 = vand.u32 %v34, 4294901760
    %v106 = vsub.f32 %v34, %v105
    %v107 = vand.u32 %v106, 4294901760
    %v108 = vsub.f32 %v106, %v107
    %v109 = vand.u32 %v108, 4294901760
    %110 = vmatmul.mubr.f32.gmra.mrb[0].mxu0 %v109
    %v111 = vpop.f32.mrb[0].mxu0
    %v112 = vadd.f32 %v30, %v111
    %v113 = vpop.f32.mrb[0].mxu0
    %114 = vdwg.mxu0
    %115 = vmatprep.subr.mxu0 0.0
    %v116 = vand.u32 %v21, 4294901760
    %v117 = vsub.f32 %v21, %v116
    %v118 = vand.u32 %v117, 4294901760
    %v119 = vsub.f32 %v117, %v118
    %v120 = vand.u32 %v119, 4294901760
    %121 = vmatpush1.msra.mxu0 %v120
    %122 = vmatprep.subr.mxu0 0.0
    %v123 = vand.u32 %v22, 4294901760
    %v124 = vsub.f32 %v22, %v123
    %v125 = vand.u32 %v124, 4294901760
    %v126 = vsub.f32 %v124, %v125
    %v127 = vand.u32 %v126, 4294901760
    %128 = vmatpush1.msra.mxu0 %v127
    %129 = vmatprep.subr.mxu0 0.0
    %v130 = vand.u32 %v23, 4294901760
    %v131 = vsub.f32 %v23, %v130
    %v132 = vand.u32 %v131, 4294901760
    %v133 = vsub.f32 %v131, %v132
    %v134 = vand.u32 %v133, 4294901760
    %135 = vmatpush1.msra.mxu0 %v134
    %136 = vmatprep.subr.mxu0 0.0
    %v137 = vand.u32 %v24, 4294901760
    %v138 = vsub.f32 %v24, %v137
    %v139 = vand.u32 %v138, 4294901760
    %v140 = vsub.f32 %v138, %v139
    %v141 = vand.u32 %v140, 4294901760
    %142 = vmatpush1.msra.mxu0 %v141
    %143 = vmatprep.subr.mxu0 0.0
    %144 = vmatpush1.msra.mxu0 0.0
    %145 = vmatprep.subr.mxu0 0.0
    %146 = vmatpush1.msra.mxu0 0.0
    %147 = vmatprep.subr.mxu0 0.0
    %148 = vmatpush1.msra.mxu0 0.0
    %149 = vmatprep.subr.mxu0 0.0
    %150 = vmatpush1.msra.mxu0 0.0
    %151 = vmatprep.subr.mxu0 0.0
    %152 = vmatpush1.msra.mxu0 0.0
    %153 = vmatprep.subr.mxu0 0.0
    %154 = vmatpush1.msra.mxu0 0.0
    %155 = vmatprep.subr.mxu0 0.0
    %156 = vmatpush1.msra.mxu0 0.0
    %157 = vmatprep.subr.mxu0 0.0
    %158 = vmatpush1.msra.mxu0 0.0
    %159 = vmatprep.subr.mxu0 0.0
    %160 = vmatpush1.msra.mxu0 0.0
    %161 = vmatprep.subr.mxu0 0.0
    %162 = vmatpush1.msra.mxu0 0.0
    %163 = vmatprep.subr.mxu0 0.0
    %164 = vmatpush1.msra.mxu0 0.0
    %165 = vmatprep.subr.mxu0 0.0
    %166 = vmatpush1.msra.mxu0 0.0
    %167 = vmatprep.subr.mxu0 0.0
    %168 = vmatpush1.msra.mxu0 0.0
    %169 = vmatprep.subr.mxu0 0.0
    %170 = vmatpush1.msra.mxu0 0.0
    %171 = vmatprep.subr.mxu0 0.0
    %172 = vmatpush1.msra.mxu0 0.0
    %173 = vmatprep.subr.mxu0 0.0
    %174 = vmatpush1.msra.mxu0 0.0
    %175 = vmatprep.subr.mxu0 0.0
    %176 = vmatpush1.msra.mxu0 0.0
    %177 = vmatprep.subr.mxu0 0.0
    %178 = vmatpush1.msra.mxu0 0.0
    %179 = vmatprep.subr.mxu0 0.0
    %180 = vmatpush1.msra.mxu0 0.0
    %181 = vmatprep.subr.mxu0 0.0
    %182 = vmatpush1.msra.mxu0 0.0
    %183 = vmatprep.subr.mxu0 0.0
    %184 = vmatpush1.msra.mxu0 0.0
    %185 = vmatprep.subr.mxu0 0.0
    %186 = vmatpush1.msra.mxu0 0.0
    %187 = vmatprep.subr.mxu0 0.0
    %188 = vmatpush1.msra.mxu0 0.0
    %189 = vmatprep.subr.mxu0 0.0
    %190 = vmatpush1.msra.mxu0 0.0
    %191 = vmatprep.subr.mxu0 0.0
    %192 = vmatpush1.msra.mxu0 0.0
    %193 = vmatprep.subr.mxu0 0.0
    %194 = vmatpush1.msra.mxu0 0.0
    %195 = vmatprep.subr.mxu0 0.0
    %196 = vmatpush1.msra.mxu0 0.0
    %197 = vmatprep.subr.mxu0 0.0
    %198 = vmatpush1.msra.mxu0 0.0
    %199 = vmatprep.mubr.f32.mxu0 0.0
    %v200 = vand.u32 %v34, 4294901760
    %201 = vmatmul.mubr.f32.gmra.mrb[0].mxu0 %v200
    %v202 = vpop.f32.mrb[0].mxu0
    %v203 = vadd.f32 %v112, %v202
    %v204 = vpop.f32.mrb[0].mxu0
    %205 = vdwg.mxu0
    %206 = vmatprep.subr.mxu0 0.0
    %v207 = vand.u32 %v21, 4294901760
    %v208 = vsub.f32 %v21, %v207
    %209 = vmatpush1.msra.mxu0 %v208
    %210 = vmatprep.subr.mxu0 0.0
    %v211 = vand.u32 %v22, 4294901760
    %v212 = vsub.f32 %v22, %v211
    %213 = vmatpush1.msra.mxu0 %v212
    %214 = vmatprep.subr.mxu0 0.0
    %v215 = vand.u32 %v23, 4294901760
    %v216 = vsub.f32 %v23, %v215
    %217 = vmatpush1.msra.mxu0 %v216
    %218 = vmatprep.subr.mxu0 0.0
    %v219 = vand.u32 %v24, 4294901760
    %v220 = vsub.f32 %v24, %v219
    %221 = vmatpush1.msra.mxu0 %v220
    %222 = vmatprep.subr.mxu0 0.0
    %223 = vmatpush1.msra.mxu0 0.0
    %224 = vmatprep.subr.mxu0 0.0
    %225 = vmatpush1.msra.mxu0 0.0
    %226 = vmatprep.subr.mxu0 0.0
    %227 = vmatpush1.msra.mxu0 0.0
    %228 = vmatprep.subr.mxu0 0.0
    %229 = vmatpush1.msra.mxu0 0.0
    %230 = vmatprep.subr.mxu0 0.0
    %231 = vmatpush1.msra.mxu0 0.0
    %232 = vmatprep.subr.mxu0 0.0
    %233 = vmatpush1.msra.mxu0 0.0
    %234 = vmatprep.subr.mxu0 0.0
    %235 = vmatpush1.msra.mxu0 0.0
    %236 = vmatprep.subr.mxu0 0.0
    %237 = vmatpush1.msra.mxu0 0.0
    %238 = vmatprep.subr.mxu0 0.0
    %239 = vmatpush1.msra.mxu0 0.0
    %240 = vmatprep.subr.mxu0 0.0
    %241 = vmatpush1.msra.mxu0 0.0
    %242 = vmatprep.subr.mxu0 0.0
    %243 = vmatpush1.msra.mxu0 0.0
    %244 = vmatprep.subr.mxu0 0.0
    %245 = vmatpush1.msra.mxu0 0.0
    %246 = vmatprep.subr.mxu0 0.0
    %247 = vmatpush1.msra.mxu0 0.0
    %248 = vmatprep.subr.mxu0 0.0
    %249 = vmatpush1.msra.mxu0 0.0
    %250 = vmatprep.subr.mxu0 0.0
    %251 = vmatpush1.msra.mxu0 0.0
    %252 = vmatprep.subr.mxu0 0.0
    %253 = vmatpush1.msra.mxu0 0.0
    %254 = vmatprep.subr.mxu0 0.0
    %255 = vmatpush1.msra.mxu0 0.0
    %256 = vmatprep.subr.mxu0 0.0
    %257 = vmatpush1.msra.mxu0 0.0
    %258 = vmatprep.subr.mxu0 0.0
    %259 = vmatpush1.msra.mxu0 0.0
    %260 = vmatprep.subr.mxu0 0.0
    %261 = vmatpush1.msra.mxu0 0.0
    %262 = vmatprep.subr.mxu0 0.0
    %263 = vmatpush1.msra.mxu0 0.0
    %264 = vmatprep.subr.mxu0 0.0
    %265 = vmatpush1.msra.mxu0 0.0
    %266 = vmatprep.subr.mxu0 0.0
    %267 = vmatpush1.msra.mxu0 0.0
    %268 = vmatprep.subr.mxu0 0.0
    %269 = vmatpush1.msra.mxu0 0.0
    %270 = vmatprep.subr.mxu0 0.0
    %271 = vmatpush1.msra.mxu0 0.0
    %272 = vmatprep.subr.mxu0 0.0
    %273 = vmatpush1.msra.mxu0 0.0
    %274 = vmatprep.subr.mxu0 0.0
    %275 = vmatpush1.msra.mxu0 0.0
    %276 = vmatprep.subr.mxu0 0.0
    %277 = vmatpush1.msra.mxu0 0.0
    %278 = vmatprep.mubr.f32.mxu0 0.0
    %v279 = vand.u32 %v34, 4294901760
    %v280 = vsub.f32 %v34, %v279
    %281 = vmatmul.mubr.f32.gmra.mrb[0].mxu0 %v280
    %v282 = vpop.f32.mrb[0].mxu0
    %v283 = vadd.f32 %v203, %v282
    %v284 = vpop.f32.mrb[0].mxu0
    %285 = vdwg.mxu0
    %286 = vmatprep.subr.mxu0 0.0
    %v287 = vand.u32 %v21, 4294901760
    %288 = vmatpush1.msra.mxu0 %v287
    %289 = vmatprep.subr.mxu0 0.0
    %v290 = vand.u32 %v22, 4294901760
    %291 = vmatpush1.msra.mxu0 %v290
    %292 = vmatprep.subr.mxu0 0.0
    %v293 = vand.u32 %v23, 4294901760
    %294 = vmatpush1.msra.mxu0 %v293
    %295 = vmatprep.subr.mxu0 0.0
    %v296 = vand.u32 %v24, 4294901760
    %297 = vmatpush1.msra.mxu0 %v296
    %298 = vmatprep.subr.mxu0 0.0
    %299 = vmatpush1.msra.mxu0 0.0
    %300 = vmatprep.subr.mxu0 0.0
    %301 = vmatpush1.msra.mxu0 0.0
    %302 = vmatprep.subr.mxu0 0.0
    %303 = vmatpush1.msra.mxu0 0.0
    %304 = vmatprep.subr.mxu0 0.0
    %305 = vmatpush1.msra.mxu0 0.0
    %306 = vmatprep.subr.mxu0 0.0
    %307 = vmatpush1.msra.mxu0 0.0
    %308 = vmatprep.subr.mxu0 0.0
    %309 = vmatpush1.msra.mxu0 0.0
    %310 = vmatprep.subr.mxu0 0.0
    %311 = vmatpush1.msra.mxu0 0.0
    %312 = vmatprep.subr.mxu0 0.0
    %313 = vmatpush1.msra.mxu0 0.0
    %314 = vmatprep.subr.mxu0 0.0
    %315 = vmatpush1.msra.mxu0 0.0
    %316 = vmatprep.subr.mxu0 0.0
    %317 = vmatpush1.msra.mxu0 0.0
    %318 = vmatprep.subr.mxu0 0.0
    %319 = vmatpush1.msra.mxu0 0.0
    %320 = vmatprep.subr.mxu0 0.0
    %321 = vmatpush1.msra.mxu0 0.0
    %322 = vmatprep.subr.mxu0 0.0
    %323 = vmatpush1.msra.mxu0 0.0
    %324 = vmatprep.subr.mxu0 0.0
    %325 = vmatpush1.msra.mxu0 0.0
    %326 = vmatprep.subr.mxu0 0.0
    %327 = vmatpush1.msra.mxu0 0.0
    %328 = vmatprep.subr.mxu0 0.0
    %329 = vmatpush1.msra.mxu0 0.0
    %330 = vmatprep.subr.mxu0 0.0
    %331 = vmatpush1.msra.mxu0 0.0
    %332 = vmatprep.subr.mxu0 0.0
    %333 = vmatpush1.msra.mxu0 0.0
    %334 = vmatprep.subr.mxu0 0.0
    %335 = vmatpush1.msra.mxu0 0.0
    %336 = vmatprep.subr.mxu0 0.0
    %337 = vmatpush1.msra.mxu0 0.0
    %338 = vmatprep.subr.mxu0 0.0
    %339 = vmatpush1.msra.mxu0 0.0
    %340 = vmatprep.subr.mxu0 0.0
    %341 = vmatpush1.msra.mxu0 0.0
    %342 = vmatprep.subr.mxu0 0.0
    %343 = vmatpush1.msra.mxu0 0.0
    %344 = vmatprep.subr.mxu0 0.0
    %345 = vmatpush1.msra.mxu0 0.0
    %346 = vmatprep.subr.mxu0 0.0
    %347 = vmatpush1.msra.mxu0 0.0
    %348 = vmatprep.subr.mxu0 0.0
    %349 = vmatpush1.msra.mxu0 0.0
    %350 = vmatprep.subr.mxu0 0.0
    %351 = vmatpush1.msra.mxu0 0.0
    %352 = vmatprep.subr.mxu0 0.0
    %353 = vmatpush1.msra.mxu0 0.0
    %354 = vmatprep.mubr.f32.mxu0 0.0
    %v355 = vand.u32 %v34, 4294901760
    %v356 = vsub.f32 %v34, %v355
    %v357 = vand.u32 %v356, 4294901760
    %358 = vmatmul.mubr.f32.gmra.mrb[0].mxu0 %v357
    %v359 = vpop.f32.mrb[0].mxu0
    %v360 = vadd.f32 %v283, %v359
    %v361 = vpop.f32.mrb[0].mxu0
    %362 = vdwg.mxu0
    %363 = vmatprep.subr.mxu0 0.0
    %v364 = vand.u32 %v21, 4294901760
    %v365 = vsub.f32 %v21, %v364
    %v366 = vand.u32 %v365, 4294901760
    %367 = vmatpush1.msra.mxu0 %v366
    %368 = vmatprep.subr.mxu0 0.0
    %v369 = vand.u32 %v22, 4294901760
    %v370 = vsub.f32 %v22, %v369
    %v371 = vand.u32 %v370, 4294901760
    %372 = vmatpush1.msra.mxu0 %v371
    %373 = vmatprep.subr.mxu0 0.0
    %v374 = vand.u32 %v23, 4294901760
    %v375 = vsub.f32 %v23, %v374
    %v376 = vand.u32 %v375, 4294901760
    %377 = vmatpush1.msra.mxu0 %v376
    %378 = vmatprep.subr.mxu0 0.0
    %v379 = vand.u32 %v24, 4294901760
    %v380 = vsub.f32 %v24, %v379
    %v381 = vand.u32 %v380, 4294901760
    %382 = vmatpush1.msra.mxu0 %v381
    %383 = vmatprep.subr.mxu0 0.0
    %384 = vmatpush1.msra.mxu0 0.0
    %385 = vmatprep.subr.mxu0 0.0
    %386 = vmatpush1.msra.mxu0 0.0
    %387 = vmatprep.subr.mxu0 0.0
    %388 = vmatpush1.msra.mxu0 0.0
    %389 = vmatprep.subr.mxu0 0.0
    %390 = vmatpush1.msra.mxu0 0.0
    %391 = vmatprep.subr.mxu0 0.0
    %392 = vmatpush1.msra.mxu0 0.0
    %393 = vmatprep.subr.mxu0 0.0
    %394 = vmatpush1.msra.mxu0 0.0
    %395 = vmatprep.subr.mxu0 0.0
    %396 = vmatpush1.msra.mxu0 0.0
    %397 = vmatprep.subr.mxu0 0.0
    %398 = vmatpush1.msra.mxu0 0.0
    %399 = vmatprep.subr.mxu0 0.0
    %400 = vmatpush1.msra.mxu0 0.0
    %401 = vmatprep.subr.mxu0 0.0
    %402 = vmatpush1.msra.mxu0 0.0
    %403 = vmatprep.subr.mxu0 0.0
    %404 = vmatpush1.msra.mxu0 0.0
    %405 = vmatprep.subr.mxu0 0.0
    %406 = vmatpush1.msra.mxu0 0.0
    %407 = vmatprep.subr.mxu0 0.0
    %408 = vmatpush1.msra.mxu0 0.0
    %409 = vmatprep.subr.mxu0 0.0
    %410 = vmatpush1.msra.mxu0 0.0
    %411 = vmatprep.subr.mxu0 0.0
    %412 = vmatpush1.msra.mxu0 0.0
    %413 = vmatprep.subr.mxu0 0.0
    %414 = vmatpush1.msra.mxu0 0.0
    %415 = vmatprep.subr.mxu0 0.0
    %416 = vmatpush1.msra.mxu0 0.0
    %417 = vmatprep.subr.mxu0 0.0
    %418 = vmatpush1.msra.mxu0 0.0
    %419 = vmatprep.subr.mxu0 0.0
    %420 = vmatpush1.msra.mxu0 0.0
    %421 = vmatprep.subr.mxu0 0.0
    %422 = vmatpush1.msra.mxu0 0.0
    %423 = vmatprep.subr.mxu0 0.0
    %424 = vmatpush1.msra.mxu0 0.0
    %425 = vmatprep.subr.mxu0 0.0
    %426 = vmatpush1.msra.mxu0 0.0
    %427 = vmatprep.subr.mxu0 0.0
    %428 = vmatpush1.msra.mxu0 0.0
    %429 = vmatprep.subr.mxu0 0.0
    %430 = vmatpush1.msra.mxu0 0.0
    %431 = vmatprep.subr.mxu0 0.0
    %432 = vmatpush1.msra.mxu0 0.0
    %433 = vmatprep.subr.mxu0 0.0
    %434 = vmatpush1.msra.mxu0 0.0
    %435 = vmatprep.subr.mxu0 0.0
    %436 = vmatpush1.msra.mxu0 0.0
    %437 = vmatprep.subr.mxu0 0.0
    %438 = vmatpush1.msra.mxu0 0.0
    %439 = vmatprep.mubr.f32.mxu0 0.0
    %v440 = vand.u32 %v34, 4294901760
    %441 = vmatmul.mubr.f32.gmra.mrb[0].mxu0 %v440
    %v442 = vpop.f32.mrb[0].mxu0
    %v443 = vadd.f32 %v360, %v442
    %v444 = vpop.f32.mrb[0].mxu0
    %445 = vdwg.mxu0
    %446 = vmatprep.subr.mxu0 0.0
    %v447 = vand.u32 %v21, 4294901760
    %448 = vmatpush1.msra.mxu0 %v447
    %449 = vmatprep.subr.mxu0 0.0
    %v450 = vand.u32 %v22, 4294901760
    %451 = vmatpush1.msra.mxu0 %v450
    %452 = vmatprep.subr.mxu0 0.0
    %v453 = vand.u32 %v23, 4294901760
    %454 = vmatpush1.msra.mxu0 %v453
    %455 = vmatprep.subr.mxu0 0.0
    %v456 = vand.u32 %v24, 4294901760
    %457 = vmatpush1.msra.mxu0 %v456
    %458 = vmatprep.subr.mxu0 0.0
    %459 = vmatpush1.msra.mxu0 0.0
    %460 = vmatprep.subr.mxu0 0.0
    %461 = vmatpush1.msra.mxu0 0.0
    %462 = vmatprep.subr.mxu0 0.0
    %463 = vmatpush1.msra.mxu0 0.0
    %464 = vmatprep.subr.mxu0 0.0
    %465 = vmatpush1.msra.mxu0 0.0
    %466 = vmatprep.subr.mxu0 0.0
    %467 = vmatpush1.msra.mxu0 0.0
    %468 = vmatprep.subr.mxu0 0.0
    %469 = vmatpush1.msra.mxu0 0.0
    %470 = vmatprep.subr.mxu0 0.0
    %471 = vmatpush1.msra.mxu0 0.0
    %472 = vmatprep.subr.mxu0 0.0
    %473 = vmatpush1.msra.mxu0 0.0
    %474 = vmatprep.subr.mxu0 0.0
    %475 = vmatpush1.msra.mxu0 0.0
    %476 = vmatprep.subr.mxu0 0.0
    %477 = vmatpush1.msra.mxu0 0.0
    %478 = vmatprep.subr.mxu0 0.0
    %479 = vmatpush1.msra.mxu0 0.0
    %480 = vmatprep.subr.mxu0 0.0
    %481 = vmatpush1.msra.mxu0 0.0
    %482 = vmatprep.subr.mxu0 0.0
    %483 = vmatpush1.msra.mxu0 0.0
    %484 = vmatprep.subr.mxu0 0.0
    %485 = vmatpush1.msra.mxu0 0.0
    %486 = vmatprep.subr.mxu0 0.0
    %487 = vmatpush1.msra.mxu0 0.0
    %488 = vmatprep.subr.mxu0 0.0
    %489 = vmatpush1.msra.mxu0 0.0
    %490 = vmatprep.subr.mxu0 0.0
    %491 = vmatpush1.msra.mxu0 0.0
    %492 = vmatprep.subr.mxu0 0.0
    %493 = vmatpush1.msra.mxu0 0.0
    %494 = vmatprep.subr.mxu0 0.0
    %495 = vmatpush1.msra.mxu0 0.0
    %496 = vmatprep.subr.mxu0 0.0
    %497 = vmatpush1.msra.mxu0 0.0
    %498 = vmatprep.subr.mxu0 0.0
    %499 = vmatpush1.msra.mxu0 0.0
    %500 = vmatprep.subr.mxu0 0.0
    %501 = vmatpush1.msra.mxu0 0.0
    %502 = vmatprep.subr.mxu0 0.0
    %503 = vmatpush1.msra.mxu0 0.0
    %504 = vmatprep.subr.mxu0 0.0
    %505 = vmatpush1.msra.mxu0 0.0
    %506 = vmatprep.subr.mxu0 0.0
    %507 = vmatpush1.msra.mxu0 0.0
    %508 = vmatprep.subr.mxu0 0.0
    %509 = vmatpush1.msra.mxu0 0.0
    %510 = vmatprep.subr.mxu0 0.0
    %511 = vmatpush1.msra.mxu0 0.0
    %512 = vmatprep.subr.mxu0 0.0
    %513 = vmatpush1.msra.mxu0 0.0
    %514 = vmatprep.mubr.f32.mxu0 0.0
    %v515 = vand.u32 %v34, 4294901760
    %516 = vmatmul.mubr.f32.gmra.mrb[0].mxu0 %v515
    %v517 = vpop.f32.mrb[0].mxu0
    %v518 = vadd.f32 %v443, %v517
    %v519 = vpop.f32.mrb[0].mxu0
    %520 = vdwg.mxu0
    %vm521 = vcmask 162816
    %522 = vst.msk [vmem:[#allocation2] sm:$0xff] %vm521, %v518
    %v523 = vld [vmem:[%s1] sm:$0xff]
    %v524 = vld [vmem:[%s1 + $0x8] sm:$0xff]
    %v525 = vld [vmem:[%s1 + $0x10] sm:$0xff]
    %v526 = vld [vmem:[%s1 + $0x18] sm:$0xff]
    %vm527 = vcmask 64512
    %v529 = vsel %vm527, %v523, 0
    %v532 = vsel %vm527, %v524, 0
    %v535 = vsel %vm527, %v525, 0
    %v538 = vsel %vm527, %v526, 0
    %540 = vmatprep.subr.mxu0 0.0
    %v541 = vand.u32 %v518, 4294901760
    %542 = vmatpush1.msra.mxu0 %v541
    %543 = vmatprep.subr.mxu0 0.0
    %544 = vmatpush1.msra.mxu0 0.0
    %545 = vmatprep.subr.mxu0 0.0
    %546 = vmatpush1.msra.mxu0 0.0
    %547 = vmatprep.subr.mxu0 0.0
    %548 = vmatpush1.msra.mxu0 0.0
    %549 = vmatprep.subr.mxu0 0.0
    %550 = vmatpush1.msra.mxu0 0.0
    %551 = vmatprep.subr.mxu0 0.0
    %552 = vmatpush1.msra.mxu0 0.0
    %553 = vmatprep.subr.mxu0 0.0
    %554 = vmatpush1.msra.mxu0 0.0
    %555 = vmatprep.subr.mxu0 0.0
    %556 = vmatpush1.msra.mxu0 0.0
    %557 = vmatprep.subr.mxu0 0.0
    %558 = vmatpush1.msra.mxu0 0.0
    %559 = vmatprep.subr.mxu0 0.0
    %560 = vmatpush1.msra.mxu0 0.0
    %561 = vmatprep.subr.mxu0 0.0
    %562 = vmatpush1.msra.mxu0 0.0
    %563 = vmatprep.subr.mxu0 0.0
    %564 = vmatpush1.msra.mxu0 0.0
    %565 = vmatprep.subr.mxu0 0.0
    %566 = vmatpush1.msra.mxu0 0.0
    %567 = vmatprep.subr.mxu0 0.0
    %568 = vmatpush1.msra.mxu0 0.0
    %569 = vmatprep.subr.mxu0 0.0
    %570 = vmatpush1.msra.mxu0 0.0
    %571 = vmatprep.subr.mxu0 0.0
    %572 = vmatpush1.msra.mxu0 0.0
    %573 = vmatprep.subr.mxu0 0.0
    %574 = vmatpush1.msra.mxu0 0.0
    %575 = vmatprep.subr.mxu0 0.0
    %576 = vmatpush1.msra.mxu0 0.0
    %577 = vmatprep.subr.mxu0 0.0
    %578 = vmatpush1.msra.mxu0 0.0
    %579 = vmatprep.subr.mxu0 0.0
    %580 = vmatpush1.msra.mxu0 0.0
    %581 = vmatprep.subr.mxu0 0.0
    %582 = vmatpush1.msra.mxu0 0.0
    %583 = vmatprep.subr.mxu0 0.0
    %584 = vmatpush1.msra.mxu0 0.0
    %585 = vmatprep.subr.mxu0 0.0
    %586 = vmatpush1.msra.mxu0 0.0
    %587 = vmatprep.subr.mxu0 0.0
    %588 = vmatpush1.msra.mxu0 0.0
    %589 = vmatprep.subr.mxu0 0.0
    %590 = vmatpush1.msra.mxu0 0.0
    %591 = vmatprep.subr.mxu0 0.0
    %592 = vmatpush1.msra.mxu0 0.0
    %593 = vmatprep.subr.mxu0 0.0
    %594 = vmatpush1.msra.mxu0 0.0
    %595 = vmatprep.subr.mxu0 0.0
    %596 = vmatpush1.msra.mxu0 0.0
    %597 = vmatprep.subr.mxu0 0.0
    %598 = vmatpush1.msra.mxu0 0.0
    %599 = vmatprep.subr.mxu0 0.0
    %600 = vmatpush1.msra.mxu0 0.0
    %601 = vmatprep.subr.mxu0 0.0
    %602 = vmatpush1.msra.mxu0 0.0
    %603 = vmatprep.subr.mxu0 0.0
    %604 = vmatpush1.msra.mxu0 0.0
    %605 = vmatprep.mubr.f32.mxu0 0.0
    %v606 = vand.u32 %v529, 4294901760
    %v607 = vsub.f32 %v529, %v606
    %v608 = vand.u32 %v607, 4294901760
    %v609 = vsub.f32 %v607, %v608
    %v610 = vand.u32 %v609, 4294901760
    %611 = vmatmul.mubr.f32.gmra.mrb[0].mxu0 %v610
    %v612 = vpop.f32.mrb[0].mxu0
    %v613 = vadd.f32 0.0, %v612
    %v614 = vpop.f32.mrb[0].mxu0
    %615 = vmatprep.mubr.f32.mxu0 0.0
    %v616 = vand.u32 %v532, 4294901760
    %v617 = vsub.f32 %v532, %v616
    %v618 = vand.u32 %v617, 4294901760
    %v619 = vsub.f32 %v617, %v618
    %v620 = vand.u32 %v619, 4294901760
    %621 = vmatmul.mubr.f32.gmra.mrb[0].mxu0 %v620
    %v622 = vpop.f32.mrb[0].mxu0
    %v623 = vadd.f32 0.0, %v622
    %v624 = vpop.f32.mrb[0].mxu0
    %625 = vmatprep.mubr.f32.mxu0 0.0
    %v626 = vand.u32 %v535, 4294901760
    %v627 = vsub.f32 %v535, %v626
    %v628 = vand.u32 %v627, 4294901760
    %v629 = vsub.f32 %v627, %v628
    %v630 = vand.u32 %v629, 4294901760
    %631 = vmatmul.mubr.f32.gmra.mrb[0].mxu0 %v630
    %v632 = vpop.f32.mrb[0].mxu0
    %v633 = vadd.f32 0.0, %v632
    %v634 = vpop.f32.mrb[0].mxu0
    %635 = vmatprep.mubr.f32.mxu0 0.0
    %v636 = vand.u32 %v538, 4294901760
    %v637 = vsub.f32 %v538, %v636
    %v638 = vand.u32 %v637, 4294901760
    %v639 = vsub.f32 %v637, %v638
    %v640 = vand.u32 %v639, 4294901760
    %641 = vmatmul.mubr.f32.gmra.mrb[0].mxu0 %v640
    %v642 = vpop.f32.mrb[0].mxu0
    %v643 = vadd.f32 0.0, %v642
    %v644 = vpop.f32.mrb[0].mxu0
    %645 = vdwg.mxu0
    %646 = vmatprep.subr.mxu0 0.0
    %v647 = vand.u32 %v518, 4294901760
    %v648 = vsub.f32 %v518, %v647
    %v649 = vand.u32 %v648, 4294901760
    %v650 = vsub.f32 %v648, %v649
    %v651 = vand.u32 %v650, 4294901760
    %652 = vmatpush1.msra.mxu0 %v651
    %653 = vmatprep.subr.mxu0 0.0
    %654 = vmatpush1.msra.mxu0 0.0
    %655 = vmatprep.subr.mxu0 0.0
    %656 = vmatpush1.msra.mxu0 0.0
    %657 = vmatprep.subr.mxu0 0.0
    %658 = vmatpush1.msra.mxu0 0.0
    %659 = vmatprep.subr.mxu0 0.0
    %660 = vmatpush1.msra.mxu0 0.0
    %661 = vmatprep.subr.mxu0 0.0
    %662 = vmatpush1.msra.mxu0 0.0
    %663 = vmatprep.subr.mxu0 0.0
    %664 = vmatpush1.msra.mxu0 0.0
    %665 = vmatprep.subr.mxu0 0.0
    %666 = vmatpush1.msra.mxu0 0.0
    %667 = vmatprep.subr.mxu0 0.0
    %668 = vmatpush1.msra.mxu0 0.0
    %669 = vmatprep.subr.mxu0 0.0
    %670 = vmatpush1.msra.mxu0 0.0
    %671 = vmatprep.subr.mxu0 0.0
    %672 = vmatpush1.msra.mxu0 0.0
    %673 = vmatprep.subr.mxu0 0.0
    %674 = vmatpush1.msra.mxu0 0.0
    %675 = vmatprep.subr.mxu0 0.0
    %676 = vmatpush1.msra.mxu0 0.0
    %677 = vmatprep.subr.mxu0 0.0
    %678 = vmatpush1.msra.mxu0 0.0
    %679 = vmatprep.subr.mxu0 0.0
    %680 = vmatpush1.msra.mxu0 0.0
    %681 = vmatprep.subr.mxu0 0.0
    %682 = vmatpush1.msra.mxu0 0.0
    %683 = vmatprep.subr.mxu0 0.0
    %684 = vmatpush1.msra.mxu0 0.0
    %685 = vmatprep.subr.mxu0 0.0
    %686 = vmatpush1.msra.mxu0 0.0
    %687 = vmatprep.subr.mxu0 0.0
    %688 = vmatpush1.msra.mxu0 0.0
    %689 = vmatprep.subr.mxu0 0.0
    %690 = vmatpush1.msra.mxu0 0.0
    %691 = vmatprep.subr.mxu0 0.0
    %692 = vmatpush1.msra.mxu0 0.0
    %693 = vmatprep.subr.mxu0 0.0
    %694 = vmatpush1.msra.mxu0 0.0
    %695 = vmatprep.subr.mxu0 0.0
    %696 = vmatpush1.msra.mxu0 0.0
    %697 = vmatprep.subr.mxu0 0.0
    %698 = vmatpush1.msra.mxu0 0.0
    %699 = vmatprep.subr.mxu0 0.0
    %700 = vmatpush1.msra.mxu0 0.0
    %701 = vmatprep.subr.mxu0 0.0
    %702 = vmatpush1.msra.mxu0 0.0
    %703 = vmatprep.subr.mxu0 0.0
    %704 = vmatpush1.msra.mxu0 0.0
    %705 = vmatprep.subr.mxu0 0.0
    %706 = vmatpush1.msra.mxu0 0.0
    %707 = vmatprep.subr.mxu0 0.0
    %708 = vmatpush1.msra.mxu0 0.0
    %709 = vmatprep.subr.mxu0 0.0
    %710 = vmatpush1.msra.mxu0 0.0
    %711 = vmatprep.subr.mxu0 0.0
    %712 = vmatpush1.msra.mxu0 0.0
    %713 = vmatprep.subr.mxu0 0.0
    %714 = vmatpush1.msra.mxu0 0.0
    %715 = vmatprep.mubr.f32.mxu0 0.0
    %v716 = vand.u32 %v529, 4294901760
    %717 = vmatmul.mubr.f32.gmra.mrb[0].mxu0 %v716
    %v718 = vpop.f32.mrb[0].mxu0
    %v719 = vadd.f32 %v613, %v718
    %v720 = vpop.f32.mrb[0].mxu0
    %721 = vmatprep.mubr.f32.mxu0 0.0
    %v722 = vand.u32 %v532, 4294901760
    %723 = vmatmul.mubr.f32.gmra.mrb[0].mxu0 %v722
    %v724 = vpop.f32.mrb[0].mxu0
    %v725 = vadd.f32 %v623, %v724
    %v726 = vpop.f32.mrb[0].mxu0
    %727 = vmatprep.mubr.f32.mxu0 0.0
    %v728 = vand.u32 %v535, 4294901760
    %729 = vmatmul.mubr.f32.gmra.mrb[0].mxu0 %v728
    %v730 = vpop.f32.mrb[0].mxu0
    %v731 = vadd.f32 %v633, %v730
    %v732 = vpop.f32.mrb[0].mxu0
    %733 = vmatprep.mubr.f32.mxu0 0.0
    %v734 = vand.u32 %v538, 4294901760
    %735 = vmatmul.mubr.f32.gmra.mrb[0].mxu0 %v734
    %v736 = vpop.f32.mrb[0].mxu0
    %v737 = vadd.f32 %v643, %v736
    %v738 = vpop.f32.mrb[0].mxu0
    %739 = vdwg.mxu0
    %740 = vmatprep.subr.mxu0 0.0
    %v741 = vand.u32 %v518, 4294901760
    %v742 = vsub.f32 %v518, %v741
    %743 = vmatpush1.msra.mxu0 %v742
    %744 = vmatprep.subr.mxu0 0.0
    %745 = vmatpush1.msra.mxu0 0.0
    %746 = vmatprep.subr.mxu0 0.0
    %747 = vmatpush1.msra.mxu0 0.0
    %748 = vmatprep.subr.mxu0 0.0
    %749 = vmatpush1.msra.mxu0 0.0
    %750 = vmatprep.subr.mxu0 0.0
    %751 = vmatpush1.msra.mxu0 0.0
    %752 = vmatprep.subr.mxu0 0.0
    %753 = vmatpush1.msra.mxu0 0.0
    %754 = vmatprep.subr.mxu0 0.0
    %755 = vmatpush1.msra.mxu0 0.0
    %756 = vmatprep.subr.mxu0 0.0
    %757 = vmatpush1.msra.mxu0 0.0
    %758 = vmatprep.subr.mxu0 0.0
    %759 = vmatpush1.msra.mxu0 0.0
    %760 = vmatprep.subr.mxu0 0.0
    %761 = vmatpush1.msra.mxu0 0.0
    %762 = vmatprep.subr.mxu0 0.0
    %763 = vmatpush1.msra.mxu0 0.0
    %764 = vmatprep.subr.mxu0 0.0
    %765 = vmatpush1.msra.mxu0 0.0
    %766 = vmatprep.subr.mxu0 0.0
    %767 = vmatpush1.msra.mxu0 0.0
    %768 = vmatprep.subr.mxu0 0.0
    %769 = vmatpush1.msra.mxu0 0.0
    %770 = vmatprep.subr.mxu0 0.0
    %771 = vmatpush1.msra.mxu0 0.0
    %772 = vmatprep.subr.mxu0 0.0
    %773 = vmatpush1.msra.mxu0 0.0
    %774 = vmatprep.subr.mxu0 0.0
    %775 = vmatpush1.msra.mxu0 0.0
    %776 = vmatprep.subr.mxu0 0.0
    %777 = vmatpush1.msra.mxu0 0.0
    %778 = vmatprep.subr.mxu0 0.0
    %779 = vmatpush1.msra.mxu0 0.0
    %780 = vmatprep.subr.mxu0 0.0
    %781 = vmatpush1.msra.mxu0 0.0
    %782 = vmatprep.subr.mxu0 0.0
    %783 = vmatpush1.msra.mxu0 0.0
    %784 = vmatprep.subr.mxu0 0.0
    %785 = vmatpush1.msra.mxu0 0.0
    %786 = vmatprep.subr.mxu0 0.0
    %787 = vmatpush1.msra.mxu0 0.0
    %788 = vmatprep.subr.mxu0 0.0
    %789 = vmatpush1.msra.mxu0 0.0
    %790 = vmatprep.subr.mxu0 0.0
    %791 = vmatpush1.msra.mxu0 0.0
    %792 = vmatprep.subr.mxu0 0.0
    %793 = vmatpush1.msra.mxu0 0.0
    %794 = vmatprep.subr.mxu0 0.0
    %795 = vmatpush1.msra.mxu0 0.0
    %796 = vmatprep.subr.mxu0 0.0
    %797 = vmatpush1.msra.mxu0 0.0
    %798 = vmatprep.subr.mxu0 0.0
    %799 = vmatpush1.msra.mxu0 0.0
    %800 = vmatprep.subr.mxu0 0.0
    %801 = vmatpush1.msra.mxu0 0.0
    %802 = vmatprep.subr.mxu0 0.0
    %803 = vmatpush1.msra.mxu0 0.0
    %804 = vmatprep.subr.mxu0 0.0
    %805 = vmatpush1.msra.mxu0 0.0
    %806 = vmatprep.mubr.f32.mxu0 0.0
    %v807 = vand.u32 %v529, 4294901760
    %v808 = vsub.f32 %v529, %v807
    %809 = vmatmul.mubr.f32.gmra.mrb[0].mxu0 %v808
    %v810 = vpop.f32.mrb[0].mxu0
    %v811 = vadd.f32 %v719, %v810
    %v812 = vpop.f32.mrb[0].mxu0
    %813 = vmatprep.mubr.f32.mxu0 0.0
    %v814 = vand.u32 %v532, 4294901760
    %v815 = vsub.f32 %v532, %v814
    %816 = vmatmul.mubr.f32.gmra.mrb[0].mxu0 %v815
    %v817 = vpop.f32.mrb[0].mxu0
    %v818 = vadd.f32 %v725, %v817
    %v819 = vpop.f32.mrb[0].mxu0
    %820 = vmatprep.mubr.f32.mxu0 0.0
    %v821 = vand.u32 %v535, 4294901760
    %v822 = vsub.f32 %v535, %v821
    %823 = vmatmul.mubr.f32.gmra.mrb[0].mxu0 %v822
    %v824 = vpop.f32.mrb[0].mxu0
    %v825 = vadd.f32 %v731, %v824
    %v826 = vpop.f32.mrb[0].mxu0
    %827 = vmatprep.mubr.f32.mxu0 0.0
    %v828 = vand.u32 %v538, 4294901760
    %v829 = vsub.f32 %v538, %v828
    %830 = vmatmul.mubr.f32.gmra.mrb[0].mxu0 %v829
    %v831 = vpop.f32.mrb[0].mxu0
    %v832 = vadd.f32 %v737, %v831
    %v833 = vpop.f32.mrb[0].mxu0
    %834 = vdwg.mxu0
    %835 = vmatprep.subr.mxu0 0.0
    %v836 = vand.u32 %v518, 4294901760
    %837 = vmatpush1.msra.mxu0 %v836
    %838 = vmatprep.subr.mxu0 0.0
    %839 = vmatpush1.msra.mxu0 0.0
    %840 = vmatprep.subr.mxu0 0.0
    %841 = vmatpush1.msra.mxu0 0.0
    %842 = vmatprep.subr.mxu0 0.0
    %843 = vmatpush1.msra.mxu0 0.0
    %844 = vmatprep.subr.mxu0 0.0
    %845 = vmatpush1.msra.mxu0 0.0
    %846 = vmatprep.subr.mxu0 0.0
    %847 = vmatpush1.msra.mxu0 0.0
    %848 = vmatprep.subr.mxu0 0.0
    %849 = vmatpush1.msra.mxu0 0.0
    %850 = vmatprep.subr.mxu0 0.0
    %851 = vmatpush1.msra.mxu0 0.0
    %852 = vmatprep.subr.mxu0 0.0
    %853 = vmatpush1.msra.mxu0 0.0
    %854 = vmatprep.subr.mxu0 0.0
    %855 = vmatpush1.msra.mxu0 0.0
    %856 = vmatprep.subr.mxu0 0.0
    %857 = vmatpush1.msra.mxu0 0.0
    %858 = vmatprep.subr.mxu0 0.0
    %859 = vmatpush1.msra.mxu0 0.0
    %860 = vmatprep.subr.mxu0 0.0
    %861 = vmatpush1.msra.mxu0 0.0
    %862 = vmatprep.subr.mxu0 0.0
    %863 = vmatpush1.msra.mxu0 0.0
    %864 = vmatprep.subr.mxu0 0.0
    %865 = vmatpush1.msra.mxu0 0.0
    %866 = vmatprep.subr.mxu0 0.0
    %867 = vmatpush1.msra.mxu0 0.0
    %868 = vmatprep.subr.mxu0 0.0
    %869 = vmatpush1.msra.mxu0 0.0
    %870 = vmatprep.subr.mxu0 0.0
    %871 = vmatpush1.msra.mxu0 0.0
    %872 = vmatprep.subr.mxu0 0.0
    %873 = vmatpush1.msra.mxu0 0.0
    %874 = vmatprep.subr.mxu0 0.0
    %875 = vmatpush1.msra.mxu0 0.0
    %876 = vmatprep.subr.mxu0 0.0
    %877 = vmatpush1.msra.mxu0 0.0
    %878 = vmatprep.subr.mxu0 0.0
    %879 = vmatpush1.msra.mxu0 0.0
    %880 = vmatprep.subr.mxu0 0.0
    %881 = vmatpush1.msra.mxu0 0.0
    %882 = vmatprep.subr.mxu0 0.0
    %883 = vmatpush1.msra.mxu0 0.0
    %884 = vmatprep.subr.mxu0 0.0
    %885 = vmatpush1.msra.mxu0 0.0
    %886 = vmatprep.subr.mxu0 0.0
    %887 = vmatpush1.msra.mxu0 0.0
    %888 = vmatprep.subr.mxu0 0.0
    %889 = vmatpush1.msra.mxu0 0.0
    %890 = vmatprep.subr.mxu0 0.0
    %891 = vmatpush1.msra.mxu0 0.0
    %892 = vmatprep.subr.mxu0 0.0
    %893 = vmatpush1.msra.mxu0 0.0
    %894 = vmatprep.subr.mxu0 0.0
    %895 = vmatpush1.msra.mxu0 0.0
    %896 = vmatprep.subr.mxu0 0.0
    %897 = vmatpush1.msra.mxu0 0.0
    %898 = vmatprep.subr.mxu0 0.0
    %899 = vmatpush1.msra.mxu0 0.0
    %900 = vmatprep.mubr.f32.mxu0 0.0
    %v901 = vand.u32 %v529, 4294901760
    %v902 = vsub.f32 %v529, %v901
    %v903 = vand.u32 %v902, 4294901760
    %904 = vmatmul.mubr.f32.gmra.mrb[0].mxu0 %v903
    %v905 = vpop.f32.mrb[0].mxu0
    %v906 = vadd.f32 %v811, %v905
    %v907 = vpop.f32.mrb[0].mxu0
    %908 = vmatprep.mubr.f32.mxu0 0.0
    %v909 = vand.u32 %v532, 4294901760
    %v910 = vsub.f32 %v532, %v909
    %v911 = vand.u32 %v910, 4294901760
    %912 = vmatmul.mubr.f32.gmra.mrb[0].mxu0 %v911
    %v913 = vpop.f32.mrb[0].mxu0
    %v914 = vadd.f32 %v818, %v913
    %v915 = vpop.f32.mrb[0].mxu0
    %916 = vmatprep.mubr.f32.mxu0 0.0
    %v917 = vand.u32 %v535, 4294901760
    %v918 = vsub.f32 %v535, %v917
    %v919 = vand.u32 %v918, 4294901760
    %920 = vmatmul.mubr.f32.gmra.mrb[0].mxu0 %v919
    %v921 = vpop.f32.mrb[0].mxu0
    %v922 = vadd.f32 %v825, %v921
    %v923 = vpop.f32.mrb[0].mxu0
    %924 = vmatprep.mubr.f32.mxu0 0.0
    %v925 = vand.u32 %v538, 4294901760
    %v926 = vsub.f32 %v538, %v925
    %v927 = vand.u32 %v926, 4294901760
    %928 = vmatmul.mubr.f32.gmra.mrb[0].mxu0 %v927
    %v929 = vpop.f32.mrb[0].mxu0
    %v930 = vadd.f32 %v832, %v929
    %v931 = vpop.f32.mrb[0].mxu0
    %932 = vdwg.mxu0
    %933 = vmatprep.subr.mxu0 0.0
    %v934 = vand.u32 %v518, 4294901760
    %v935 = vsub.f32 %v518, %v934
    %v936 = vand.u32 %v935, 4294901760
    %937 = vmatpush1.msra.mxu0 %v936
    %938 = vmatprep.subr.mxu0 0.0
    %939 = vmatpush1.msra.mxu0 0.0
    %940 = vmatprep.subr.mxu0 0.0
    %941 = vmatpush1.msra.mxu0 0.0
    %942 = vmatprep.subr.mxu0 0.0
    %943 = vmatpush1.msra.mxu0 0.0
    %944 = vmatprep.subr.mxu0 0.0
    %945 = vmatpush1.msra.mxu0 0.0
    %946 = vmatprep.subr.mxu0 0.0
    %947 = vmatpush1.msra.mxu0 0.0
    %948 = vmatprep.subr.mxu0 0.0
    %949 = vmatpush1.msra.mxu0 0.0
    %950 = vmatprep.subr.mxu0 0.0
    %951 = vmatpush1.msra.mxu0 0.0
    %952 = vmatprep.subr.mxu0 0.0
    %953 = vmatpush1.msra.mxu0 0.0
    %954 = vmatprep.subr.mxu0 0.0
    %955 = vmatpush1.msra.mxu0 0.0
    %956 = vmatprep.subr.mxu0 0.0
    %957 = vmatpush1.msra.mxu0 0.0
    %958 = vmatprep.subr.mxu0 0.0
    %959 = vmatpush1.msra.mxu0 0.0
    %960 = vmatprep.subr.mxu0 0.0
    %961 = vmatpush1.msra.mxu0 0.0
    %962 = vmatprep.subr.mxu0 0.0
    %963 = vmatpush1.msra.mxu0 0.0
    %964 = vmatprep.subr.mxu0 0.0
    %965 = vmatpush1.msra.mxu0 0.0
    %966 = vmatprep.subr.mxu0 0.0
    %967 = vmatpush1.msra.mxu0 0.0
    %968 = vmatprep.subr.mxu0 0.0
    %969 = vmatpush1.msra.mxu0 0.0
    %970 = vmatprep.subr.mxu0 0.0
    %971 = vmatpush1.msra.mxu0 0.0
    %972 = vmatprep.subr.mxu0 0.0
    %973 = vmatpush1.msra.mxu0 0.0
    %974 = vmatprep.subr.mxu0 0.0
    %975 = vmatpush1.msra.mxu0 0.0
    %976 = vmatprep.subr.mxu0 0.0
    %977 = vmatpush1.msra.mxu0 0.0
    %978 = vmatprep.subr.mxu0 0.0
    %979 = vmatpush1.msra.mxu0 0.0
    %980 = vmatprep.subr.mxu0 0.0
    %981 = vmatpush1.msra.mxu0 0.0
    %982 = vmatprep.subr.mxu0 0.0
    %983 = vmatpush1.msra.mxu0 0.0
    %984 = vmatprep.subr.mxu0 0.0
    %985 = vmatpush1.msra.mxu0 0.0
    %986 = vmatprep.subr.mxu0 0.0
    %987 = vmatpush1.msra.mxu0 0.0
    %988 = vmatprep.subr.mxu0 0.0
    %989 = vmatpush1.msra.mxu0 0.0
    %990 = vmatprep.subr.mxu0 0.0
    %991 = vmatpush1.msra.mxu0 0.0
    %992 = vmatprep.subr.mxu0 0.0
    %993 = vmatpush1.msra.mxu0 0.0
    %994 = vmatprep.subr.mxu0 0.0
    %995 = vmatpush1.msra.mxu0 0.0
    %996 = vmatprep.subr.mxu0 0.0
    %997 = vmatpush1.msra.mxu0 0.0
    %998 = vmatprep.subr.mxu0 0.0
    %999 = vmatpush1.msra.mxu0 0.0
    %1000 = vmatprep.mubr.f32.mxu0 0.0
    %v1001 = vand.u32 %v529, 4294901760
    %1002 = vmatmul.mubr.f32.gmra.mrb[0].mxu0 %v1001
    %v1003 = vpop.f32.mrb[0].mxu0
    %v1004 = vadd.f32 %v906, %v1003
    %v1005 = vpop.f32.mrb[0].mxu0
    %1006 = vmatprep.mubr.f32.mxu0 0.0
    %v1007 = vand.u32 %v532, 4294901760
    %1008 = vmatmul.mubr.f32.gmra.mrb[0].mxu0 %v1007
    %v1009 = vpop.f32.mrb[0].mxu0
    %v1010 = vadd.f32 %v914, %v1009
    %v1011 = vpop.f32.mrb[0].mxu0
    %1012 = vmatprep.mubr.f32.mxu0 0.0
    %v1013 = vand.u32 %v535, 4294901760
    %1014 = vmatmul.mubr.f32.gmra.mrb[0].mxu0 %v1013
    %v1015 = vpop.f32.mrb[0].mxu0
    %v1016 = vadd.f32 %v922, %v1015
    %v1017 = vpop.f32.mrb[0].mxu0
    %1018 = vmatprep.mubr.f32.mxu0 0.0
    %v1019 = vand.u32 %v538, 4294901760
    %1020 = vmatmul.mubr.f32.gmra.mrb[0].mxu0 %v1019
    %v1021 = vpop.f32.mrb[0].mxu0
    %v1022 = vadd.f32 %v930, %v1021
    %v1023 = vpop.f32.mrb[0].mxu0
    %1024 = vdwg.mxu0
    %1025 = vmatprep.subr.mxu0 0.0
    %v1026 = vand.u32 %v518, 4294901760
    %1027 = vmatpush1.msra.mxu0 %v1026
    %1028 = vmatprep.subr.mxu0 0.0
    %1029 = vmatpush1.msra.mxu0 0.0
    %1030 = vmatprep.subr.mxu0 0.0
    %1031 = vmatpush1.msra.mxu0 0.0
    %1032 = vmatprep.subr.mxu0 0.0
    %1033 = vmatpush1.msra.mxu0 0.0
    %1034 = vmatprep.subr.mxu0 0.0
    %1035 = vmatpush1.msra.mxu0 0.0
    %1036 = vmatprep.subr.mxu0 0.0
    %1037 = vmatpush1.msra.mxu0 0.0
    %1038 = vmatprep.subr.mxu0 0.0
    %1039 = vmatpush1.msra.mxu0 0.0
    %1040 = vmatprep.subr.mxu0 0.0
    %1041 = vmatpush1.msra.mxu0 0.0
    %1042 = vmatprep.subr.mxu0 0.0
    %1043 = vmatpush1.msra.mxu0 0.0
    %1044 = vmatprep.subr.mxu0 0.0
    %1045 = vmatpush1.msra.mxu0 0.0
    %1046 = vmatprep.subr.mxu0 0.0
    %1047 = vmatpush1.msra.mxu0 0.0
    %1048 = vmatprep.subr.mxu0 0.0
    %1049 = vmatpush1.msra.mxu0 0.0
    %1050 = vmatprep.subr.mxu0 0.0
    %1051 = vmatpush1.msra.mxu0 0.0
    %1052 = vmatprep.subr.mxu0 0.0
    %1053 = vmatpush1.msra.mxu0 0.0
    %1054 = vmatprep.subr.mxu0 0.0
    %1055 = vmatpush1.msra.mxu0 0.0
    %1056 = vmatprep.subr.mxu0 0.0
    %1057 = vmatpush1.msra.mxu0 0.0
    %1058 = vmatprep.subr.mxu0 0.0
    %1059 = vmatpush1.msra.mxu0 0.0
    %1060 = vmatprep.subr.mxu0 0.0
    %1061 = vmatpush1.msra.mxu0 0.0
    %1062 = vmatprep.subr.mxu0 0.0
    %1063 = vmatpush1.msra.mxu0 0.0
    %1064 = vmatprep.subr.mxu0 0.0
    %1065 = vmatpush1.msra.mxu0 0.0
    %1066 = vmatprep.subr.mxu0 0.0
    %1067 = vmatpush1.msra.mxu0 0.0
    %1068 = vmatprep.subr.mxu0 0.0
    %1069 = vmatpush1.msra.mxu0 0.0
    %1070 = vmatprep.subr.mxu0 0.0
    %1071 = vmatpush1.msra.mxu0 0.0
    %1072 = vmatprep.subr.mxu0 0.0
    %1073 = vmatpush1.msra.mxu0 0.0
    %1074 = vmatprep.subr.mxu0 0.0
    %1075 = vmatpush1.msra.mxu0 0.0
    %1076 = vmatprep.subr.mxu0 0.0
    %1077 = vmatpush1.msra.mxu0 0.0
    %1078 = vmatprep.subr.mxu0 0.0
    %1079 = vmatpush1.msra.mxu0 0.0
    %1080 = vmatprep.subr.mxu0 0.0
    %1081 = vmatpush1.msra.mxu0 0.0
    %1082 = vmatprep.subr.mxu0 0.0
    %1083 = vmatpush1.msra.mxu0 0.0
    %1084 = vmatprep.subr.mxu0 0.0
    %1085 = vmatpush1.msra.mxu0 0.0
    %1086 = vmatprep.subr.mxu0 0.0
    %1087 = vmatpush1.msra.mxu0 0.0
    %1088 = vmatprep.subr.mxu0 0.0
    %1089 = vmatpush1.msra.mxu0 0.0
    %1090 = vmatprep.mubr.f32.mxu0 0.0
    %v1091 = vand.u32 %v529, 4294901760
    %1092 = vmatmul.mubr.f32.gmra.mrb[0].mxu0 %v1091
    %v1093 = vpop.f32.mrb[0].mxu0
    %v1094 = vadd.f32 %v1004, %v1093
    %v1095 = vpop.f32.mrb[0].mxu0
    %1096 = vmatprep.mubr.f32.mxu0 0.0
    %v1097 = vand.u32 %v532, 4294901760
    %1098 = vmatmul.mubr.f32.gmra.mrb[0].mxu0 %v1097
    %v1099 = vpop.f32.mrb[0].mxu0
    %v1100 = vadd.f32 %v1010, %v1099
    %v1101 = vpop.f32.mrb[0].mxu0
    %1102 = vmatprep.mubr.f32.mxu0 0.0
    %v1103 = vand.u32 %v535, 4294901760
    %1104 = vmatmul.mubr.f32.gmra.mrb[0].mxu0 %v1103
    %v1105 = vpop.f32.mrb[0].mxu0
    %v1106 = vadd.f32 %v1016, %v1105
    %v1107 = vpop.f32.mrb[0].mxu0
    %1108 = vmatprep.mubr.f32.mxu0 0.0
    %v1109 = vand.u32 %v538, 4294901760
    %1110 = vmatmul.mubr.f32.gmra.mrb[0].mxu0 %v1109
    %v1111 = vpop.f32.mrb[0].mxu0
    %v1112 = vadd.f32 %v1022, %v1111
    %v1113 = vpop.f32.mrb[0].mxu0
    %1114 = vdwg.mxu0
    %1115 = vst.msk [vmem:[%s5] sm:$0xff] %vm521, %v1094
    %1116 = vst.msk [vmem:[%s5 + $0x8] sm:$0xff] %vm521, %v1100
    %1117 = vst.msk [vmem:[%s5 + $0x10] sm:$0xff] %vm521, %v1106
    %1118 = vst.msk [vmem:[%s5 + $0x18] sm:$0xff] %vm521, %v1112
    // Predicated region
    $region18: #{tpu_custom_call.1} parent=1 // pred_check
      _
    $region19: #{tpu_custom_call.1} parent=1 // pred_check_branch
      %1120 = sbr.rel (0) target = $region21
    $region20: #{tpu_custom_call.1} parent=1 // pred_region
      %s1122 = ssub.s32 128, 128
      %1123 = vsyncadd [#allocation3], %s1122
      %s1125 = sshll.u32 [#allocation2], 4
      %s1126 = int_to_ptr.vmem [resolvable:$true] %s1125
      %1128 = dma.vmem_to_hbm [thread:$0]  %s1126, 128, %s4, [#allocation3]
    $region21: #{tpu_custom_call.1} parent=1 // pred_fallthru
      _
    // Predicated region
    $region22: #{tpu_custom_call.1} parent=1 // pred_check
      _
    $region23: #{tpu_custom_call.1} parent=1 // pred_check_branch
      %1130 = sbr.rel (0) target = $region25
    $region24: #{tpu_custom_call.1} parent=1 // pred_region
      _
    $region25: #{tpu_custom_call.1} parent=1 // pred_fallthru
      _
    // Predicated region
    $region26: #{tpu_custom_call.1} parent=1 // pred_check
      _
    $region27: #{tpu_custom_call.1} parent=1 // pred_check_branch
      %1132 = sbr.rel (0) target = $region29
    $region28: #{tpu_custom_call.1} parent=1 // pred_region
      %1133 = dma.done [#allocation3], 128
    $region29: #{tpu_custom_call.1} parent=1 // pred_fallthru
      _
    // Predicated region
    $region30: #{tpu_custom_call.1} parent=1 // pred_check
      _
    $region31: #{tpu_custom_call.1} parent=1 // pred_check_branch
      %1135 = sbr.rel (0) target = $region33
    $region32: #{tpu_custom_call.1} parent=1 // pred_region
      _
    $region33: #{tpu_custom_call.1} parent=1 // pred_fallthru
      _
    %1136 = vsyncpa [#allocation3], 1

</llo_original>
